<compile_context>
chip_gen: v5e
topology: v5e:2x2
jax: 0.10.0
libtpu: 0.0.40
codegen_flags: <defaults>
</compile_context>

<pallas_src>
import functools

import jax
import jax.numpy as jnp
from jax import lax
from jax.experimental import pallas as pl
from jax.experimental.pallas import tpu as pltpu

EPS = 1e-6  # module default (p=2, eps=1e-6, swap=False)


# --------------------------------------------------------------------------
# Generation-aware hardware queries (all failure-tolerant).
# --------------------------------------------------------------------------
def _tpu_info():
    try:
        return pltpu.get_tpu_info()
    except Exception:
        return None


def _vmem_limit_bytes():
    info = _tpu_info()
    vmem_phys = 0
    if info is not None:
        try:
            vmem_phys = int(getattr(info, "vmem_capacity_bytes", 0) or 0)
        except Exception:
            vmem_phys = 0
    if vmem_phys <= 0:
        vmem_phys = 64 * 1024 * 1024  # conservative fallback (v7x-sized)
    # 96 MiB on 128-MiB chips (v5e/v6e), 48 MiB on 64-MiB-per-TC v7x.
    return int(min(vmem_phys * 3 // 4, 96 * 1024 * 1024))


def _num_tensorcores():
    """Number of TensorCores the grid's leading 'parallel' axis can shard over."""
    info = _tpu_info()
    if info is not None:
        for name in ("num_cores", "core_count", "tensorcore_count",
                     "num_tensorcores", "cores_per_chip"):
            v = getattr(info, name, None)
            if isinstance(v, int) and v >= 1:
                return int(min(v, 2))
        # Heuristic fallback: v7x exposes 64 MiB VMEM per TC and has 2 TCs/chip;
        # v5e/v6e expose 128 MiB and have a single TC.
        try:
            vmem = int(getattr(info, "vmem_capacity_bytes", 0) or 0)
            if 0 < vmem <= 64 * 1024 * 1024:
                return 2
        except Exception:
            pass
    return 1


# --------------------------------------------------------------------------
# Kernel
# --------------------------------------------------------------------------
def _triplet_logexp_kernel(a_ref, p_ref, n_ref, out_ref, acc_ref, *,
                           total_rows, tile_n, num_inner, needs_mask):
    """One (tile_n, D) row block per grid step.

    grid = (num_outer [parallel across TCs], num_inner [arbitrary reduction]).
    Each outer index accumulates its rows into acc_ref (tile_n, 1) and emits a
    partial sum into its own lane-dense (8, 128) output block on the last
    inner step.
    """
    c = pl.program_id(0)
    i = pl.program_id(1)

    @pl.when(i == 0)
    def _():
        acc_ref[...] = jnp.zeros_like(acc_ref)

    a = a_ref[...].astype(jnp.float32)
    p = p_ref[...].astype(jnp.float32)
    n = n_ref[...].astype(jnp.float32)

    # F.pairwise_distance adds eps to the *difference* before the norm.
    d_p = jnp.sqrt(jnp.sum(jnp.square(a - p + EPS), axis=-1, keepdims=True))
    d_n = jnp.sqrt(jnp.sum(jnp.square(a - n + EPS), axis=-1, keepdims=True))

    # Matches torch.log(1 + torch.exp(x)) (naive softplus, as in the module;
    # intentionally NOT logaddexp so overflow behaviour matches PyTorch).
    dist = jnp.log1p(jnp.exp(d_p - d_n))  # (tile_n, 1)

    if needs_mask:
        # Flat tile id from the *unclamped* grid position, so clamped
        # duplicate tail tiles contribute zero. Only boundary / duplicate
        # tiles pay for the iota + compare + select.
        flat_tile = c * num_inner + i
        is_full = flat_tile < (total_rows // tile_n)  # fully in-bounds tiles

        @pl.when(is_full)
        def _():
            acc_ref[...] += dist

        @pl.when(jnp.logical_not(is_full))
        def _():
            row = flat_tile * tile_n + lax.broadcasted_iota(
                jnp.int32, (tile_n, 1), 0)
            acc_ref[...] += jnp.where(row < total_rows, dist, 0.0)
    else:
        acc_ref[...] += dist

    @pl.when(i == num_inner - 1)
    def _():
        psum = jnp.sum(acc_ref[...])  # single cross-sublane reduce per core
        r0 = lax.broadcasted_iota(jnp.int32, (8, 128), 0) == 0
        c0 = lax.broadcasted_iota(jnp.int32, (8, 128), 1) == 0
        out_ref[...] = jnp.where(r0 & c0, psum, jnp.float32(0.0))


# --------------------------------------------------------------------------
# Wrapper
# --------------------------------------------------------------------------
def triplet_log_exp_loss(anchor, positive, negative, *, tile_n=None):
    """Pallas implementation of TripletLogExpLoss.forward (p=2, eps=1e-6, swap=False).

    anchor, positive, negative: (N, D) arrays (f32 or bf16). Returns scalar f32.
    """
    assert anchor.shape == positive.shape == negative.shape
    assert anchor.ndim == 2, "Input must be a 2D matrix."
    N, D = anchor.shape
    itemsize = jnp.dtype(anchor.dtype).itemsize

    vmem_limit = _vmem_limit_bytes()

    # ---- VMEM-formula tile sizing (no artificial 4096 cap) ---------------
    if tile_n is None:
        # Per-row bytes: 3 inputs x 2 pipeline buffers in the input dtype,
        # plus ~2 live f32 temporaries of width D (diff / square), so bf16
        # inputs don't overshoot once cast to f32 in-kernel (v7x has only
        # 48 MiB of scoped budget here).
        bytes_per_row = D * (3 * 2 * itemsize + 2 * 4)
        tile_n = ((vmem_limit // 2) // bytes_per_row) // 8 * 8
        tile_n = max(8, min(tile_n, 16384))
    # Never bigger than the (8-rounded) data itself.
    tile_n = int(min(tile_n, max(8, pl.cdiv(N, 8) * 8)))

    total_tiles = pl.cdiv(N, tile_n)

    # ---- generation-aware outer split (1 on v5e/v6e, 2 on v7x) -----------
    num_outer = max(1, min(_num_tensorcores(), total_tiles))
    num_inner = pl.cdiv(total_tiles, num_outer)
    grid = (num_outer, num_inner)

    # Mask is only needed for a ragged tail or clamped duplicate tiles.
    needs_mask = (N % tile_n != 0) or (total_tiles != num_outer * num_inner)

    def row_map(c, i):
        # Clamp so duplicated tail tiles never DMA out of bounds; their rows
        # are masked out inside the kernel.
        return (jnp.minimum(c * num_inner + i, total_tiles - 1), 0)

    row_spec = pl.BlockSpec((tile_n, D), row_map)

    cost = pl.CostEstimate(
        flops=8 * N * D + 8 * N,
        transcendentals=4 * N,           # 2x sqrt + exp + log1p per row
        bytes_accessed=3 * N * D * itemsize + num_outer * 8 * 128 * 4,
    )

    out = pl.pallas_call(
        functools.partial(
            _triplet_logexp_kernel,
            total_rows=N, tile_n=tile_n, num_inner=num_inner,
            needs_mask=needs_mask),
        out_shape=jax.ShapeDtypeStruct((num_outer * 8, 128), jnp.float32),
        grid_spec=pltpu.PrefetchScalarGridSpec(
            num_scalar_prefetch=0,
            grid=grid,
            in_specs=[row_spec, row_spec, row_spec],
            out_specs=pl.BlockSpec((8, 128), lambda c, i: (c, 0)),
            scratch_shapes=[pltpu.VMEM((tile_n, 1), jnp.float32)],
        ),
        compiler_params=pltpu.CompilerParams(
            dimension_semantics=("parallel", "arbitrary"),
            vmem_limit_bytes=vmem_limit,
        ),
        cost_estimate=cost,
    )(anchor, positive, negative)

    # Final cross-core combine + mean (tiny, done in plain JAX).
    return (jnp.sum(out) / jnp.float32(N)).astype(jnp.float32)


# --------------------------------------------------------------------------
# Reference + self-test
# --------------------------------------------------------------------------
def _reference(anchor, positive, negative):
    a = anchor.astype(jnp.float32)
    p = positive.astype(jnp.float32)
    n = negative.astype(jnp.float32)
    d_p = jnp.sqrt(jnp.sum(jnp.square(a - p + EPS), axis=-1))
    d_n = jnp.sqrt(jnp.sum(jnp.square(a - n + EPS), axis=-1))
    return jnp.mean(jnp.log1p(jnp.exp(d_p - d_n)))


if __name__ == "__main__":
    key = jax.random.PRNGKey(0)
    k1, k2, k3 = jax.random.split(key, 3)

    # Matches the module docstring example (100, 128).
    N, D = 100, 128
    anchor = jax.random.normal(k1, (N, D), dtype=jnp.float32)
    positive = jax.random.normal(k2, (N, D), dtype=jnp.float32)
    negative = jax.random.normal(k3, (N, D), dtype=jnp.float32)

    ref = _reference(anchor, positive, negative)

    # 1) Auto-sized tile (single padded tile; exercises tail-row masking).
    loss = jax.block_until_ready(triplet_log_exp_loss(anchor, positive, negative))
    assert jnp.allclose(loss, ref, rtol=1e-5, atol=1e-5), (loss, ref)

    # 2) Small forced tile (multi-tile reduction, possible 2-core split and
    #    clamped duplicate tail tiles on v7x).
    loss2 = jax.block_until_ready(
        triplet_log_exp_loss(anchor, positive, negative, tile_n=16))
    assert jnp.allclose(loss2, ref, rtol=1e-5, atol=1e-5), (loss2, ref)

    # 3) Evenly divisible case (exercises the statically un-masked fast path).
    N2 = 64
    a2 = anchor[:N2]
    p2 = positive[:N2]
    n2 = negative[:N2]
    ref2 = _reference(a2, p2, n2)
    loss3 = jax.block_until_ready(triplet_log_exp_loss(a2, p2, n2, tile_n=16))
    assert jnp.allclose(loss3, ref2, rtol=1e-5, atol=1e-5), (loss3, ref2)

    print("KERNEL_OK")
</pallas_src>

<mosaic_0001>
module attributes {stable_mosaic.version = 11 : i64} {
  func.func @_triplet_logexp_kernel(%arg0: i32, %arg1: i32, %arg2: memref<104x128xf32, #tpu.memory_space<vmem>>, %arg3: memref<104x128xf32, #tpu.memory_space<vmem>>, %arg4: memref<104x128xf32, #tpu.memory_space<vmem>>, %arg5: memref<8x128xf32, #tpu.memory_space<vmem>>, %arg6: memref<104x1xf32, #tpu.memory_space<vmem>>) attributes {dimension_semantics = [#tpu.dimension_semantics<parallel>, #tpu.dimension_semantics<arbitrary>], iteration_bounds = array<i64: 1, 1>, scalar_prefetch = 0 : i64, scratch_operands = 1 : i64, tpu.core_type = #tpu.core_type<tc>, window_params = [{transform_indices = @transform_0, window_bounds = array<i64: 104, 128>}, {transform_indices = @transform_1, window_bounds = array<i64: 104, 128>}, {transform_indices = @transform_2, window_bounds = array<i64: 104, 128>}, {transform_indices = @transform_3, window_bounds = array<i64: 8, 128>}]} {
    %c0_i32 = arith.constant 0 : i32
    %0 = arith.cmpi eq, %arg1, %c0_i32 : i32
    %1 = arith.extui %0 : i1 to i32
    %c0_i32_0 = arith.constant 0 : i32
    %2 = arith.cmpi ne, %1, %c0_i32_0 : i32
    scf.if %2 {
      %cst_14 = arith.constant 0.000000e+00 : f32
      %34 = vector.broadcast %cst_14 : f32 to vector<104x1xf32>
      %c0_15 = arith.constant 0 : index
      %c0_16 = arith.constant 0 : index
      %35 = vector.load %arg6[%c0_15, %c0_16] : memref<104x1xf32, #tpu.memory_space<vmem>>, vector<104x1xf32>
      tpu.vector_store %arg6[%c0_15, %c0_16], %34 {strides = array<i32>} : memref<104x1xf32, #tpu.memory_space<vmem>>, vector<104x1xf32>,
    } else {
    }
    %c0 = arith.constant 0 : index
    %c0_1 = arith.constant 0 : index
    %3 = vector.load %arg2[%c0, %c0_1] : memref<104x128xf32, #tpu.memory_space<vmem>>, vector<104x128xf32>
    %c0_2 = arith.constant 0 : index
    %c0_3 = arith.constant 0 : index
    %4 = vector.load %arg3[%c0_2, %c0_3] : memref<104x128xf32, #tpu.memory_space<vmem>>, vector<104x128xf32>
    %c0_4 = arith.constant 0 : index
    %c0_5 = arith.constant 0 : index
    %5 = vector.load %arg4[%c0_4, %c0_5] : memref<104x128xf32, #tpu.memory_space<vmem>>, vector<104x128xf32>
    %6 = arith.subf %3, %4 : vector<104x128xf32>
    %cst = arith.constant 9.99999997E-7 : f32
    %7 = vector.broadcast %cst : f32 to vector<104x128xf32>
    %8 = arith.addf %6, %7 : vector<104x128xf32>
    %9 = arith.mulf %8, %8 : vector<104x128xf32>
    %cst_6 = arith.constant dense<0.000000e+00> : vector<104xf32>
    %10 = vector.multi_reduction <add>, %9, %cst_6 [1] : vector<104x128xf32> to vector<104xf32>
    %11 = vector.shape_cast %10 : vector<104xf32> to vector<104x1xf32>
    %12 = math.sqrt %11 : vector<104x1xf32>
    %13 = arith.subf %3, %5 : vector<104x128xf32>
    %cst_7 = arith.constant 9.99999997E-7 : f32
    %14 = vector.broadcast %cst_7 : f32 to vector<104x128xf32>
    %15 = arith.addf %13, %14 : vector<104x128xf32>
    %16 = arith.mulf %15, %15 : vector<104x128xf32>
    %cst_8 = arith.constant dense<0.000000e+00> : vector<104xf32>
    %17 = vector.multi_reduction <add>, %16, %cst_8 [1] : vector<104x128xf32> to vector<104xf32>
    %18 = vector.shape_cast %17 : vector<104xf32> to vector<104x1xf32>
    %19 = math.sqrt %18 : vector<104x1xf32>
    %20 = arith.subf %12, %19 : vector<104x1xf32>
    %21 = math.exp %20 : vector<104x1xf32>
    %22 = math.log1p %21 : vector<104x1xf32>
    %c1_i32 = arith.constant 1 : i32
    %23 = arith.muli %arg0, %c1_i32 : i32
    %24 = arith.addi %23, %arg1 : i32
    %c0_i32_9 = arith.constant 0 : i32
    %25 = arith.cmpi slt, %24, %c0_i32_9 : i32
    %26 = arith.extui %25 : i1 to i32
    %c0_i32_10 = arith.constant 0 : i32
    %27 = arith.cmpi ne, %26, %c0_i32_10 : i32
    scf.if %27 {
      %c0_14 = arith.constant 0 : index
      %c0_15 = arith.constant 0 : index
      %34 = vector.load %arg6[%c0_14, %c0_15] : memref<104x1xf32, #tpu.memory_space<vmem>>, vector<104x1xf32>
      %35 = arith.addf %34, %22 : vector<104x1xf32>
      %c0_16 = arith.constant 0 : index
      %c0_17 = arith.constant 0 : index
      %36 = vector.load %arg6[%c0_16, %c0_17] : memref<104x1xf32, #tpu.memory_space<vmem>>, vector<104x1xf32>
      tpu.vector_store %arg6[%c0_16, %c0_17], %35 {strides = array<i32>} : memref<104x1xf32, #tpu.memory_space<vmem>>, vector<104x1xf32>,
    } else {
    }
    %true = arith.constant true
    %28 = arith.xori %25, %true : i1
    %29 = arith.extui %28 : i1 to i32
    %c0_i32_11 = arith.constant 0 : i32
    %30 = arith.cmpi ne, %29, %c0_i32_11 : i32
    scf.if %30 {
      %c104_i32 = arith.constant 104 : i32
      %34 = arith.muli %24, %c104_i32 : i32
      %35 = tpu.iota {dimensions = array<i32: 0>} : vector<104x1xi32>
      %36 = vector.broadcast %34 : i32 to vector<104x1xi32>
      %37 = arith.addi %36, %35 : vector<104x1xi32>
      %c0_14 = arith.constant 0 : index
      %c0_15 = arith.constant 0 : index
      %38 = vector.load %arg6[%c0_14, %c0_15] : memref<104x1xf32, #tpu.memory_space<vmem>>, vector<104x1xf32>
      %c100_i32 = arith.constant 100 : i32
      %39 = vector.broadcast %c100_i32 : i32 to vector<104x1xi32>
      %40 = arith.cmpi slt, %37, %39 : vector<104x1xi32>
      %cst_16 = arith.constant 0.000000e+00 : f32
      %41 = vector.broadcast %cst_16 : f32 to vector<104x1xf32>
      %42 = arith.select %40, %22, %41 : vector<104x1xi1>, vector<104x1xf32>
      %43 = arith.addf %38, %42 : vector<104x1xf32>
      %c0_17 = arith.constant 0 : index
      %c0_18 = arith.constant 0 : index
      %44 = vector.load %arg6[%c0_17, %c0_18] : memref<104x1xf32, #tpu.memory_space<vmem>>, vector<104x1xf32>
      tpu.vector_store %arg6[%c0_17, %c0_18], %43 {strides = array<i32>} : memref<104x1xf32, #tpu.memory_space<vmem>>, vector<104x1xf32>,
    } else {
    }
    %c0_i32_12 = arith.constant 0 : i32
    %31 = arith.cmpi eq, %arg1, %c0_i32_12 : i32
    %32 = arith.extui %31 : i1 to i32
    %c0_i32_13 = arith.constant 0 : i32
    %33 = arith.cmpi ne, %32, %c0_i32_13 : i32
    scf.if %33 {
      %c0_14 = arith.constant 0 : index
      %c0_15 = arith.constant 0 : index
      %34 = vector.load %arg6[%c0_14, %c0_15] : memref<104x1xf32, #tpu.memory_space<vmem>>, vector<104x1xf32>
      %35 = vector.shape_cast %34 : vector<104x1xf32> to vector<1x104x1xf32>
      %cst_16 = arith.constant dense<0.000000e+00> : vector<1xf32>
      %36 = vector.multi_reduction <add>, %35, %cst_16 [1, 2] : vector<1x104x1xf32> to vector<1xf32>
      %37 = vector.shape_cast %36 : vector<1xf32> to vector<1x1x1xf32>
      %38 = vector.extract %37[0, 0, 0] : f32 from vector<1x1x1xf32>
      %39 = tpu.iota {dimensions = array<i32: 0>} : vector<8x128xi32>
      %c0_i32_17 = arith.constant 0 : i32
      %40 = vector.broadcast %c0_i32_17 : i32 to vector<8x128xi32>
      %41 = arith.cmpi eq, %39, %40 : vector<8x128xi32>
      %42 = tpu.iota {dimensions = array<i32: 1>} : vector<8x128xi32>
      %c0_i32_18 = arith.constant 0 : i32
      %43 = vector.broadcast %c0_i32_18 : i32 to vector<8x128xi32>
      %44 = arith.cmpi eq, %42, %43 : vector<8x128xi32>
      %45 = arith.andi %41, %44 : vector<8x128xi1>
      %cst_19 = arith.constant 0.000000e+00 : f32
      %46 = vector.broadcast %38 : f32 to vector<8x128xf32>
      %47 = vector.broadcast %cst_19 : f32 to vector<8x128xf32>
      %48 = arith.select %45, %46, %47 : vector<8x128xi1>, vector<8x128xf32>
      %c0_20 = arith.constant 0 : index
      %c0_21 = arith.constant 0 : index
      %49 = vector.load %arg5[%c0_20, %c0_21] : memref<8x128xf32, #tpu.memory_space<vmem>>, vector<8x128xf32>
      tpu.vector_store %arg5[%c0_20, %c0_21], %48 {strides = array<i32>} : memref<8x128xf32, #tpu.memory_space<vmem>>, vector<8x128xf32>,
    } else {
    }
    return
  }
  func.func @transform_0(%arg0: i32, %arg1: i32) -> (i32, i32) {
    %c1_i32 = arith.constant 1 : i32
    %0 = arith.muli %arg0, %c1_i32 : i32
    %1 = arith.addi %0, %arg1 : i32
    %c0_i32 = arith.constant 0 : i32
    %2 = arith.minsi %1, %c0_i32 : i32
    %c0_i32_0 = arith.constant 0 : i32
    %c0_i32_1 = arith.constant 0 : i32
    return %2, %c0_i32_0 : i32, i32
  }
  func.func @transform_1(%arg0: i32, %arg1: i32) -> (i32, i32) {
    %c1_i32 = arith.constant 1 : i32
    %0 = arith.muli %arg0, %c1_i32 : i32
    %1 = arith.addi %0, %arg1 : i32
    %c0_i32 = arith.constant 0 : i32
    %2 = arith.minsi %1, %c0_i32 : i32
    %c0_i32_0 = arith.constant 0 : i32
    %c0_i32_1 = arith.constant 0 : i32
    return %2, %c0_i32_0 : i32, i32
  }
  func.func @transform_2(%arg0: i32, %arg1: i32) -> (i32, i32) {
    %c1_i32 = arith.constant 1 : i32
    %0 = arith.muli %arg0, %c1_i32 : i32
    %1 = arith.addi %0, %arg1 : i32
    %c0_i32 = arith.constant 0 : i32
    %2 = arith.minsi %1, %c0_i32 : i32
    %c0_i32_0 = arith.constant 0 : i32
    %c0_i32_1 = arith.constant 0 : i32
    return %2, %c0_i32_0 : i32, i32
  }
  func.func @transform_3(%arg0: i32, %arg1: i32) -> (i32, i32) {
    %c0_i32 = arith.constant 0 : i32
    %c0_i32_0 = arith.constant 0 : i32
    return %arg0, %c0_i32 : i32, i32
  }
}

</mosaic_0001>

<llo_original>
// kernel: tpu_custom_call.1
$region0: #{tpu_custom_call.1}
  #allocation0 [shape = 'u32[]', space=smem, size = 0x4, offset = 0x4, fixed_abs, tag = 'smem constant byte address 0x4 - core index']
  #allocation1 [shape = 'u32[72,128]{1,0:T(1,128)}', space=vmem, size = 0x9000, scoped, tag = 'internal scratch']
  #allocation2 [shape = 'f32[104,1]{1,0:T(8,128)}', space=vmem, size = 0xd000, scoped, tag = 'scratch operand']
  %s0 = inlined_call_operand.hbm [shape: f32[100,128], index: 0, kind: input, shape index: {}]
  %s1 = inlined_call_operand.hbm [shape: f32[100,128], index: 1, kind: input, shape index: {}]
  %s2 = inlined_call_operand.hbm [shape: f32[100,128], index: 2, kind: input, shape index: {}]
  %s3 = inlined_call_operand.hbm [shape: f32[8,128], index: 3, kind: output, shape index: {}]
  %s4 = sld [smem:[#allocation0]]
  $region50: #{tpu_custom_call.1} parent=0
    _
  %s6 = ssub.s32 1, %s4
  %s7 = scalar_select 0, %s6, %s4
  $region1: #{tpu_custom_call.1} parent=0
    #allocation3 [shape = 'u8[53248]{0}', space=vmem, size = 0xd000, scoped, tag = 'input window, operand 0, single buffered']
    #allocation4 [shape = 's32[1]{0}', space=sflag, size = 0x4, scoped, tag = 'scoped memory for tpu_custom_call.1']
    #allocation5 [shape = 's32[1]{0}', space=sflag, size = 0x4, scoped, tag = 'scoped memory for tpu_custom_call.1']
    #allocation6 [shape = 'u8[53248]{0}', space=vmem, size = 0xd000, scoped, tag = 'input window, operand 1, single buffered']
    #allocation7 [shape = 's32[1]{0}', space=sflag, size = 0x4, scoped, tag = 'scoped memory for tpu_custom_call.1']
    #allocation8 [shape = 'u8[53248]{0}', space=vmem, size = 0xd000, scoped, tag = 'input window, operand 2, single buffered']
    #allocation9 [shape = 'u8[4096]{0}', space=vmem, size = 0x1000, scoped, tag = 'output window, operand 0, single buffered']
    %8 = vsyncpa [#allocation4], 0
    %9 = vsyncpa [#allocation7], 0
    %10 = vsyncpa [#allocation5], 0
    // Predicated region
    $region2: #{tpu_custom_call.1} parent=1 // pred_check
      _
    $region3: #{tpu_custom_call.1} parent=1 // pred_check_branch
      %12 = sbr.rel (0) target = $region5
    $region4: #{tpu_custom_call.1} parent=1 // pred_region
      %s13 = sadd.s32 0, 0
      %p14 = scmp.lt.s32.totalorder %s13, 0
      %s15 = scalar_select %p14, %s13, 0
      %s16 = smul.u32 13, %s15
      %18 = vsyncadd [#allocation4], 0
      %s19 = smul.addr %s16, 8
      %s20 = scalar_lea.hbm %s0, %s19
      %s21 = sshll.u32 %s20, 4
      %s22 = int_to_ptr.hbm [resolvable:$true] %s21
      %s23 = sshll.u32 [#allocation3], 4
      %s24 = int_to_ptr.vmem [resolvable:$true] %s23
      %29 = dma.hbm_to_vmem [thread:$0]  %s22, 1664, %s24, [#allocation4], 128, 128, 8
    $region5: #{tpu_custom_call.1} parent=1 // pred_fallthru
      _
    // Predicated region
    $region6: #{tpu_custom_call.1} parent=1 // pred_check
      _
    $region7: #{tpu_custom_call.1} parent=1 // pred_check_branch
      %31 = sbr.rel (0) target = $region9
    $region8: #{tpu_custom_call.1} parent=1 // pred_region
      %s32 = sadd.s32 0, 0
      %p33 = scmp.lt.s32.totalorder %s32, 0
      %s34 = scalar_select %p33, %s32, 0
      %s35 = smul.u32 13, %s34
      %37 = vsyncadd [#allocation7], 0
      %s38 = smul.addr %s35, 8
      %s39 = scalar_lea.hbm %s1, %s38
      %s40 = sshll.u32 %s39, 4
      %s41 = int_to_ptr.hbm [resolvable:$true] %s40
      %s42 = sshll.u32 [#allocation6], 4
      %s43 = int_to_ptr.vmem [resolvable:$true] %s42
      %48 = dma.hbm_to_vmem [thread:$0]  %s41, 1664, %s43, [#allocation7], 128, 128, 8
    $region9: #{tpu_custom_call.1} parent=1 // pred_fallthru
      _
    // Predicated region
    $region10: #{tpu_custom_call.1} parent=1 // pred_check
      _
    $region11: #{tpu_custom_call.1} parent=1 // pred_check_branch
      %50 = sbr.rel (0) target = $region13
    $region12: #{tpu_custom_call.1} parent=1 // pred_region
      %s51 = sadd.s32 0, 0
      %p52 = scmp.lt.s32.totalorder %s51, 0
      %s53 = scalar_select %p52, %s51, 0
      %s54 = smul.u32 13, %s53
      %56 = vsyncadd [#allocation7], 0
      %s57 = smul.addr %s54, 8
      %s58 = scalar_lea.hbm %s2, %s57
      %s59 = sshll.u32 %s58, 4
      %s60 = int_to_ptr.hbm [resolvable:$true] %s59
      %s61 = sshll.u32 [#allocation8], 4
      %s62 = int_to_ptr.vmem [resolvable:$true] %s61
      %67 = dma.hbm_to_vmem [thread:$0]  %s60, 1664, %s62, [#allocation7], 128, 128, 8
    $region13: #{tpu_custom_call.1} parent=1 // pred_fallthru
      _
    // Predicated region
    $region14: #{tpu_custom_call.1} parent=1 // pred_check
      _
    $region15: #{tpu_custom_call.1} parent=1 // pred_check_branch
      %69 = sbr.rel (0) target = $region17
    $region16: #{tpu_custom_call.1} parent=1 // pred_region
      %71 = dma.done [#allocation4], 1664
    $region17: #{tpu_custom_call.1} parent=1 // pred_fallthru
      _
    // Predicated region
    $region18: #{tpu_custom_call.1} parent=1 // pred_check
      _
    $region19: #{tpu_custom_call.1} parent=1 // pred_check_branch
      %73 = sbr.rel (0) target = $region21
    $region20: #{tpu_custom_call.1} parent=1 // pred_region
      %75 = dma.done [#allocation7], 1664
    $region21: #{tpu_custom_call.1} parent=1 // pred_fallthru
      _
    // Predicated region
    $region22: #{tpu_custom_call.1} parent=1 // pred_check
      _
    $region23: #{tpu_custom_call.1} parent=1 // pred_check_branch
      %77 = sbr.rel (0) target = $region25
    $region24: #{tpu_custom_call.1} parent=1 // pred_region
      %79 = dma.done [#allocation7], 1664
    $region25: #{tpu_custom_call.1} parent=1 // pred_fallthru
      _
    %s80 = sadd.s32 0, 0
    %p81 = scmp.lt.s32.totalorder %s80, 0
    %s82 = scalar_select %p81, %s80, 0
    %s83 = smul.u32 13, %s82
    %s84 = sadd.s32 0, 0
    %p85 = scmp.lt.s32.totalorder %s84, 0
    %s86 = scalar_select %p85, %s84, 0
    %s87 = smul.u32 13, %s86
    %s88 = sadd.s32 0, 0
    %p89 = scmp.lt.s32.totalorder %s88, 0
    %s90 = scalar_select %p89, %s88, 0
    %s91 = smul.u32 13, %s90
    %p92 = scmp.eq.s32.totalorder 0, 0
    // Predicated region
    $region26: #{tpu_custom_call.1} parent=1 // pred_check
      %p93 = pneg %p92
    $region27: #{tpu_custom_call.1} parent=1 // pred_check_branch
      %95 = sbr.rel (%p93) target = $region29
    $region28: #{tpu_custom_call.1} parent=1 // pred_region
      %vm96 = vcmask 7168
      %97 = vst.msk [vmem:[#allocation2] sm:$0xff] %vm96, 0.0
      %98 = vst.msk [vmem:[#allocation2 + $0x8] sm:$0xff] %vm96, 0.0
      %99 = vst.msk [vmem:[#allocation2 + $0x10] sm:$0xff] %vm96, 0.0
      %100 = vst.msk [vmem:[#allocation2 + $0x18] sm:$0xff] %vm96, 0.0
      %101 = vst.msk [vmem:[#allocation2 + $0x20] sm:$0xff] %vm96, 0.0
      %102 = vst.msk [vmem:[#allocation2 + $0x28] sm:$0xff] %vm96, 0.0
      %103 = vst.msk [vmem:[#allocation2 + $0x30] sm:$0xff] %vm96, 0.0
      %104 = vst.msk [vmem:[#allocation2 + $0x38] sm:$0xff] %vm96, 0.0
      %105 = vst.msk [vmem:[#allocation2 + $0x40] sm:$0xff] %vm96, 0.0
      %106 = vst.msk [vmem:[#allocation2 + $0x48] sm:$0xff] %vm96, 0.0
      %107 = vst.msk [vmem:[#allocation2 + $0x50] sm:$0xff] %vm96, 0.0
      %108 = vst.msk [vmem:[#allocation2 + $0x58] sm:$0xff] %vm96, 0.0
      %109 = vst.msk [vmem:[#allocation2 + $0x60] sm:$0xff] %vm96, 0.0
    $region29: #{tpu_custom_call.1} parent=1 // pred_fallthru
      _
    %v110 = vld [vmem:[#allocation3] sm:$0xff]
    %v111 = vld [vmem:[#allocation3 + $0x8] sm:$0xff]
    %v112 = vld [vmem:[#allocation3 + $0x10] sm:$0xff]
    %v113 = vld [vmem:[#allocation3 + $0x18] sm:$0xff]
    %v114 = vld [vmem:[#allocation3 + $0x20] sm:$0xff]
    %v115 = vld [vmem:[#allocation3 + $0x28] sm:$0xff]
    %v116 = vld [vmem:[#allocation3 + $0x30] sm:$0xff]
    %v117 = vld [vmem:[#allocation3 + $0x38] sm:$0xff]
    %v118 = vld [vmem:[#allocation3 + $0x40] sm:$0xff]
    %v119 = vld [vmem:[#allocation3 + $0x48] sm:$0xff]
    %v120 = vld [vmem:[#allocation3 + $0x50] sm:$0xff]
    %v121 = vld [vmem:[#allocation3 + $0x58] sm:$0xff]
    %v122 = vld [vmem:[#allocation3 + $0x60] sm:$0xff]
    %v123 = vld [vmem:[#allocation6] sm:$0xff]
    %v124 = vld [vmem:[#allocation6 + $0x8] sm:$0xff]
    %v125 = vld [vmem:[#allocation6 + $0x10] sm:$0xff]
    %v126 = vld [vmem:[#allocation6 + $0x18] sm:$0xff]
    %v127 = vld [vmem:[#allocation6 + $0x20] sm:$0xff]
    %v128 = vld [vmem:[#allocation6 + $0x28] sm:$0xff]
    %v129 = vld [vmem:[#allocation6 + $0x30] sm:$0xff]
    %v130 = vld [vmem:[#allocation6 + $0x38] sm:$0xff]
    %v131 = vld [vmem:[#allocation6 + $0x40] sm:$0xff]
    %v132 = vld [vmem:[#allocation6 + $0x48] sm:$0xff]
    %v133 = vld [vmem:[#allocation6 + $0x50] sm:$0xff]
    %v134 = vld [vmem:[#allocation6 + $0x58] sm:$0xff]
    %v135 = vld [vmem:[#allocation6 + $0x60] sm:$0xff]
    %v136 = vld [vmem:[#allocation8] sm:$0xff]
    %v137 = vld [vmem:[#allocation8 + $0x8] sm:$0xff]
    %v138 = vld [vmem:[#allocation8 + $0x10] sm:$0xff]
    %v139 = vld [vmem:[#allocation8 + $0x18] sm:$0xff]
    %v140 = vld [vmem:[#allocation8 + $0x20] sm:$0xff]
    %v141 = vld [vmem:[#allocation8 + $0x28] sm:$0xff]
    %v142 = vld [vmem:[#allocation8 + $0x30] sm:$0xff]
    %v143 = vld [vmem:[#allocation8 + $0x38] sm:$0xff]
    %v144 = vld [vmem:[#allocation8 + $0x40] sm:$0xff]
    %v145 = vld [vmem:[#allocation8 + $0x48] sm:$0xff]
    %v146 = vld [vmem:[#allocation8 + $0x50] sm:$0xff]
    %v147 = vld [vmem:[#allocation8 + $0x58] sm:$0xff]
    %v148 = vld [vmem:[#allocation8 + $0x60] sm:$0xff]
    %v149 = vsub.f32 %v110, %v123
    %v150 = vsub.f32 %v111, %v124
    %v151 = vsub.f32 %v112, %v125
    %v152 = vsub.f32 %v113, %v126
    %v153 = vsub.f32 %v114, %v127
    %v154 = vsub.f32 %v115, %v128
    %v155 = vsub.f32 %v116, %v129
    %v156 = vsub.f32 %v117, %v130
    %v157 = vsub.f32 %v118, %v131
    %v158 = vsub.f32 %v119, %v132
    %v159 = vsub.f32 %v120, %v133
    %v160 = vsub.f32 %v121, %v134
    %v161 = vsub.f32 %v122, %v135
    %v162 = vadd.f32 %v149, 1e-06
    %v163 = vadd.f32 %v150, 1e-06
    %v164 = vadd.f32 %v151, 1e-06
    %v165 = vadd.f32 %v152, 1e-06
    %v166 = vadd.f32 %v153, 1e-06
    %v167 = vadd.f32 %v154, 1e-06
    %v168 = vadd.f32 %v155, 1e-06
    %v169 = vadd.f32 %v156, 1e-06
    %v170 = vadd.f32 %v157, 1e-06
    %v171 = vadd.f32 %v158, 1e-06
    %v172 = vadd.f32 %v159, 1e-06
    %v173 = vadd.f32 %v160, 1e-06
    %v174 = vadd.f32 %v161, 1e-06
    %v175 = vmul.f32 %v162, %v162
    %v176 = vmul.f32 %v163, %v163
    %v177 = vmul.f32 %v164, %v164
    %v178 = vmul.f32 %v165, %v165
    %v179 = vmul.f32 %v166, %v166
    %v180 = vmul.f32 %v167, %v167
    %v181 = vmul.f32 %v168, %v168
    %v182 = vmul.f32 %v169, %v169
    %v183 = vmul.f32 %v170, %v170
    %v184 = vmul.f32 %v171, %v171
    %v185 = vmul.f32 %v172, %v172
    %v186 = vmul.f32 %v173, %v173
    %v187 = vmul.f32 %v174, %v174
    %188 = vadd.xlane.f32.xlu0 %v175
    %v189 = vpop.xlane.xlu0 %188
    %190 = vadd.xlane.f32.xlu0 %v176
    %v191 = vpop.xlane.xlu0 %190
    %192 = vadd.xlane.f32.xlu0 %v177
    %v193 = vpop.xlane.xlu0 %192
    %194 = vadd.xlane.f32.xlu0 %v178
    %v195 = vpop.xlane.xlu0 %194
    %196 = vadd.xlane.f32.xlu0 %v179
    %v197 = vpop.xlane.xlu0 %196
    %198 = vadd.xlane.f32.xlu0 %v180
    %v199 = vpop.xlane.xlu0 %198
    %200 = vadd.xlane.f32.xlu0 %v181
    %v201 = vpop.xlane.xlu0 %200
    %202 = vadd.xlane.f32.xlu0 %v182
    %v203 = vpop.xlane.xlu0 %202
    %204 = vadd.xlane.f32.xlu0 %v183
    %v205 = vpop.xlane.xlu0 %204
    %206 = vadd.xlane.f32.xlu0 %v184
    %v207 = vpop.xlane.xlu0 %206
    %208 = vadd.xlane.f32.xlu0 %v185
    %v209 = vpop.xlane.xlu0 %208
    %210 = vadd.xlane.f32.xlu0 %v186
    %v211 = vpop.xlane.xlu0 %210
    %212 = vadd.xlane.f32.xlu0 %v187
    %v213 = vpop.xlane.xlu0 %212
    %v214 = vrsqrt.pop %v189
    %v215 = vmul.f32 %v214, %v189
    %v216 = vmul.f32 %v215, %v214
    %v217 = vmul.f32 0.5, %v216
    %v218 = vsub.f32 1.5, %v217
    %v219 = vmul.f32 %v214, %v218
    %v220 = vmul.f32 %v189, %v219
    %vm221 = vcmp.eq.f32.partialorder %v189, inf
    %v222 = vsel %vm221, %v189, %v220
    %vm223 = vcmp.eq.f32.partialorder %v189, 0.0
    %v224 = vand.u32 %v189, 2147483648
    %v225 = vsel %vm223, %v224, %v222
    %v226 = vrsqrt.pop %v191
    %v227 = vmul.f32 %v226, %v191
    %v228 = vmul.f32 %v227, %v226
    %v229 = vmul.f32 0.5, %v228
    %v230 = vsub.f32 1.5, %v229
    %v231 = vmul.f32 %v226, %v230
    %v232 = vmul.f32 %v191, %v231
    %vm233 = vcmp.eq.f32.partialorder %v191, inf
    %v234 = vsel %vm233, %v191, %v232
    %vm235 = vcmp.eq.f32.partialorder %v191, 0.0
    %v236 = vand.u32 %v191, 2147483648
    %v237 = vsel %vm235, %v236, %v234
    %v238 = vrsqrt.pop %v193
    %v239 = vmul.f32 %v238, %v193
    %v240 = vmul.f32 %v239, %v238
    %v241 = vmul.f32 0.5, %v240
    %v242 = vsub.f32 1.5, %v241
    %v243 = vmul.f32 %v238, %v242
    %v244 = vmul.f32 %v193, %v243
    %vm245 = vcmp.eq.f32.partialorder %v193, inf
    %v246 = vsel %vm245, %v193, %v244
    %vm247 = vcmp.eq.f32.partialorder %v193, 0.0
    %v248 = vand.u32 %v193, 2147483648
    %v249 = vsel %vm247, %v248, %v246
    %v250 = vrsqrt.pop %v195
    %v251 = vmul.f32 %v250, %v195
    %v252 = vmul.f32 %v251, %v250
    %v253 = vmul.f32 0.5, %v252
    %v254 = vsub.f32 1.5, %v253
    %v255 = vmul.f32 %v250, %v254
    %v256 = vmul.f32 %v195, %v255
    %vm257 = vcmp.eq.f32.partialorder %v195, inf
    %v258 = vsel %vm257, %v195, %v256
    %vm259 = vcmp.eq.f32.partialorder %v195, 0.0
    %v260 = vand.u32 %v195, 2147483648
    %v261 = vsel %vm259, %v260, %v258
    %v262 = vrsqrt.pop %v197
    %v263 = vmul.f32 %v262, %v197
    %v264 = vmul.f32 %v263, %v262
    %v265 = vmul.f32 0.5, %v264
    %v266 = vsub.f32 1.5, %v265
    %v267 = vmul.f32 %v262, %v266
    %v268 = vmul.f32 %v197, %v267
    %vm269 = vcmp.eq.f32.partialorder %v197, inf
    %v270 = vsel %vm269, %v197, %v268
    %vm271 = vcmp.eq.f32.partialorder %v197, 0.0
    %v272 = vand.u32 %v197, 2147483648
    %v273 = vsel %vm271, %v272, %v270
    %v274 = vrsqrt.pop %v199
    %v275 = vmul.f32 %v274, %v199
    %v276 = vmul.f32 %v275, %v274
    %v277 = vmul.f32 0.5, %v276
    %v278 = vsub.f32 1.5, %v277
    %v279 = vmul.f32 %v274, %v278
    %v280 = vmul.f32 %v199, %v279
    %vm281 = vcmp.eq.f32.partialorder %v199, inf
    %v282 = vsel %vm281, %v199, %v280
    %vm283 = vcmp.eq.f32.partialorder %v199, 0.0
    %v284 = vand.u32 %v199, 2147483648
    %v285 = vsel %vm283, %v284, %v282
    %v286 = vrsqrt.pop %v201
    %v287 = vmul.f32 %v286, %v201
    %v288 = vmul.f32 %v287, %v286
    %v289 = vmul.f32 0.5, %v288
    %v290 = vsub.f32 1.5, %v289
    %v291 = vmul.f32 %v286, %v290
    %v292 = vmul.f32 %v201, %v291
    %vm293 = vcmp.eq.f32.partialorder %v201, inf
    %v294 = vsel %vm293, %v201, %v292
    %vm295 = vcmp.eq.f32.partialorder %v201, 0.0
    %v296 = vand.u32 %v201, 2147483648
    %v297 = vsel %vm295, %v296, %v294
    %v298 = vrsqrt.pop %v203
    %v299 = vmul.f32 %v298, %v203
    %v300 = vmul.f32 %v299, %v298
    %v301 = vmul.f32 0.5, %v300
    %v302 = vsub.f32 1.5, %v301
    %v303 = vmul.f32 %v298, %v302
    %v304 = vmul.f32 %v203, %v303
    %vm305 = vcmp.eq.f32.partialorder %v203, inf
    %v306 = vsel %vm305, %v203, %v304
    %vm307 = vcmp.eq.f32.partialorder %v203, 0.0
    %v308 = vand.u32 %v203, 2147483648
    %v309 = vsel %vm307, %v308, %v306
    %v310 = vrsqrt.pop %v205
    %v311 = vmul.f32 %v310, %v205
    %v312 = vmul.f32 %v311, %v310
    %v313 = vmul.f32 0.5, %v312
    %v314 = vsub.f32 1.5, %v313
    %v315 = vmul.f32 %v310, %v314
    %v316 = vmul.f32 %v205, %v315
    %vm317 = vcmp.eq.f32.partialorder %v205, inf
    %v318 = vsel %vm317, %v205, %v316
    %vm319 = vcmp.eq.f32.partialorder %v205, 0.0
    %v320 = vand.u32 %v205, 2147483648
    %v321 = vsel %vm319, %v320, %v318
    %v322 = vrsqrt.pop %v207
    %v323 = vmul.f32 %v322, %v207
    %v324 = vmul.f32 %v323, %v322
    %v325 = vmul.f32 0.5, %v324
    %v326 = vsub.f32 1.5, %v325
    %v327 = vmul.f32 %v322, %v326
    %v328 = vmul.f32 %v207, %v327
    %vm329 = vcmp.eq.f32.partialorder %v207, inf
    %v330 = vsel %vm329, %v207, %v328
    %vm331 = vcmp.eq.f32.partialorder %v207, 0.0
    %v332 = vand.u32 %v207, 2147483648
    %v333 = vsel %vm331, %v332, %v330
    %v334 = vrsqrt.pop %v209
    %v335 = vmul.f32 %v334, %v209
    %v336 = vmul.f32 %v335, %v334
    %v337 = vmul.f32 0.5, %v336
    %v338 = vsub.f32 1.5, %v337
    %v339 = vmul.f32 %v334, %v338
    %v340 = vmul.f32 %v209, %v339
    %vm341 = vcmp.eq.f32.partialorder %v209, inf
    %v342 = vsel %vm341, %v209, %v340
    %vm343 = vcmp.eq.f32.partialorder %v209, 0.0
    %v344 = vand.u32 %v209, 2147483648
    %v345 = vsel %vm343, %v344, %v342
    %v346 = vrsqrt.pop %v211
    %v347 = vmul.f32 %v346, %v211
    %v348 = vmul.f32 %v347, %v346
    %v349 = vmul.f32 0.5, %v348
    %v350 = vsub.f32 1.5, %v349
    %v351 = vmul.f32 %v346, %v350
    %v352 = vmul.f32 %v211, %v351
    %vm353 = vcmp.eq.f32.partialorder %v211, inf
    %v354 = vsel %vm353, %v211, %v352
    %vm355 = vcmp.eq.f32.partialorder %v211, 0.0
    %v356 = vand.u32 %v211, 2147483648
    %v357 = vsel %vm355, %v356, %v354
    %v358 = vrsqrt.pop %v213
    %v359 = vmul.f32 %v358, %v213
    %v360 = vmul.f32 %v359, %v358
    %v361 = vmul.f32 0.5, %v360
    %v362 = vsub.f32 1.5, %v361
    %v363 = vmul.f32 %v358, %v362
    %v364 = vmul.f32 %v213, %v363
    %vm365 = vcmp.eq.f32.partialorder %v213, inf
    %v366 = vsel %vm365, %v213, %v364
    %vm367 = vcmp.eq.f32.partialorder %v213, 0.0
    %v368 = vand.u32 %v213, 2147483648
    %v369 = vsel %vm367, %v368, %v366
    %v370 = vsub.f32 %v110, %v136
    %v371 = vsub.f32 %v111, %v137
    %v372 = vsub.f32 %v112, %v138
    %v373 = vsub.f32 %v113, %v139
    %v374 = vsub.f32 %v114, %v140
    %v375 = vsub.f32 %v115, %v141
    %v376 = vsub.f32 %v116, %v142
    %v377 = vsub.f32 %v117, %v143
    %v378 = vsub.f32 %v118, %v144
    %v379 = vsub.f32 %v119, %v145
    %v380 = vsub.f32 %v120, %v146
    %v381 = vsub.f32 %v121, %v147
    %v382 = vsub.f32 %v122, %v148
    %v383 = vadd.f32 %v370, 1e-06
    %v384 = vadd.f32 %v371, 1e-06
    %v385 = vadd.f32 %v372, 1e-06
    %v386 = vadd.f32 %v373, 1e-06
    %v387 = vadd.f32 %v374, 1e-06
    %v388 = vadd.f32 %v375, 1e-06
    %v389 = vadd.f32 %v376, 1e-06
    %v390 = vadd.f32 %v377, 1e-06
    %v391 = vadd.f32 %v378, 1e-06
    %v392 = vadd.f32 %v379, 1e-06
    %v393 = vadd.f32 %v380, 1e-06
    %v394 = vadd.f32 %v381, 1e-06
    %v395 = vadd.f32 %v382, 1e-06
    %v396 = vmul.f32 %v383, %v383
    %v397 = vmul.f32 %v384, %v384
    %v398 = vmul.f32 %v385, %v385
    %v399 = vmul.f32 %v386, %v386
    %v400 = vmul.f32 %v387, %v387
    %v401 = vmul.f32 %v388, %v388
    %v402 = vmul.f32 %v389, %v389
    %v403 = vmul.f32 %v390, %v390
    %v404 = vmul.f32 %v391, %v391
    %v405 = vmul.f32 %v392, %v392
    %v406 = vmul.f32 %v393, %v393
    %v407 = vmul.f32 %v394, %v394
    %v408 = vmul.f32 %v395, %v395
    %409 = vadd.xlane.f32.xlu0 %v396
    %v410 = vpop.xlane.xlu0 %409
    %411 = vadd.xlane.f32.xlu0 %v397
    %v412 = vpop.xlane.xlu0 %411
    %413 = vadd.xlane.f32.xlu0 %v398
    %v414 = vpop.xlane.xlu0 %413
    %415 = vadd.xlane.f32.xlu0 %v399
    %v416 = vpop.xlane.xlu0 %415
    %417 = vadd.xlane.f32.xlu0 %v400
    %v418 = vpop.xlane.xlu0 %417
    %419 = vadd.xlane.f32.xlu0 %v401
    %v420 = vpop.xlane.xlu0 %419
    %421 = vadd.xlane.f32.xlu0 %v402
    %v422 = vpop.xlane.xlu0 %421
    %423 = vadd.xlane.f32.xlu0 %v403
    %v424 = vpop.xlane.xlu0 %423
    %425 = vadd.xlane.f32.xlu0 %v404
    %v426 = vpop.xlane.xlu0 %425
    %427 = vadd.xlane.f32.xlu0 %v405
    %v428 = vpop.xlane.xlu0 %427
    %429 = vadd.xlane.f32.xlu0 %v406
    %v430 = vpop.xlane.xlu0 %429
    %431 = vadd.xlane.f32.xlu0 %v407
    %v432 = vpop.xlane.xlu0 %431
    %433 = vadd.xlane.f32.xlu0 %v408
    %v434 = vpop.xlane.xlu0 %433
    %v435 = vrsqrt.pop %v410
    %v436 = vmul.f32 %v435, %v410
    %v437 = vmul.f32 %v436, %v435
    %v438 = vmul.f32 0.5, %v437
    %v439 = vsub.f32 1.5, %v438
    %v440 = vmul.f32 %v435, %v439
    %v441 = vmul.f32 %v410, %v440
    %vm442 = vcmp.eq.f32.partialorder %v410, inf
    %v443 = vsel %vm442, %v410, %v441
    %vm444 = vcmp.eq.f32.partialorder %v410, 0.0
    %v445 = vand.u32 %v410, 2147483648
    %v446 = vsel %vm444, %v445, %v443
    %v447 = vrsqrt.pop %v412
    %v448 = vmul.f32 %v447, %v412
    %v449 = vmul.f32 %v448, %v447
    %v450 = vmul.f32 0.5, %v449
    %v451 = vsub.f32 1.5, %v450
    %v452 = vmul.f32 %v447, %v451
    %v453 = vmul.f32 %v412, %v452
    %vm454 = vcmp.eq.f32.partialorder %v412, inf
    %v455 = vsel %vm454, %v412, %v453
    %vm456 = vcmp.eq.f32.partialorder %v412, 0.0
    %v457 = vand.u32 %v412, 2147483648
    %v458 = vsel %vm456, %v457, %v455
    %v459 = vrsqrt.pop %v414
    %v460 = vmul.f32 %v459, %v414
    %v461 = vmul.f32 %v460, %v459
    %v462 = vmul.f32 0.5, %v461
    %v463 = vsub.f32 1.5, %v462
    %v464 = vmul.f32 %v459, %v463
    %v465 = vmul.f32 %v414, %v464
    %vm466 = vcmp.eq.f32.partialorder %v414, inf
    %v467 = vsel %vm466, %v414, %v465
    %vm468 = vcmp.eq.f32.partialorder %v414, 0.0
    %v469 = vand.u32 %v414, 2147483648
    %v470 = vsel %vm468, %v469, %v467
    %v471 = vrsqrt.pop %v416
    %v472 = vmul.f32 %v471, %v416
    %v473 = vmul.f32 %v472, %v471
    %v474 = vmul.f32 0.5, %v473
    %v475 = vsub.f32 1.5, %v474
    %v476 = vmul.f32 %v471, %v475
    %v477 = vmul.f32 %v416, %v476
    %vm478 = vcmp.eq.f32.partialorder %v416, inf
    %v479 = vsel %vm478, %v416, %v477
    %vm480 = vcmp.eq.f32.partialorder %v416, 0.0
    %v481 = vand.u32 %v416, 2147483648
    %v482 = vsel %vm480, %v481, %v479
    %v483 = vrsqrt.pop %v418
    %v484 = vmul.f32 %v483, %v418
    %v485 = vmul.f32 %v484, %v483
    %v486 = vmul.f32 0.5, %v485
    %v487 = vsub.f32 1.5, %v486
    %v488 = vmul.f32 %v483, %v487
    %v489 = vmul.f32 %v418, %v488
    %vm490 = vcmp.eq.f32.partialorder %v418, inf
    %v491 = vsel %vm490, %v418, %v489
    %vm492 = vcmp.eq.f32.partialorder %v418, 0.0
    %v493 = vand.u32 %v418, 2147483648
    %v494 = vsel %vm492, %v493, %v491
    %v495 = vrsqrt.pop %v420
    %v496 = vmul.f32 %v495, %v420
    %v497 = vmul.f32 %v496, %v495
    %v498 = vmul.f32 0.5, %v497
    %v499 = vsub.f32 1.5, %v498
    %v500 = vmul.f32 %v495, %v499
    %v501 = vmul.f32 %v420, %v500
    %vm502 = vcmp.eq.f32.partialorder %v420, inf
    %v503 = vsel %vm502, %v420, %v501
    %vm504 = vcmp.eq.f32.partialorder %v420, 0.0
    %v505 = vand.u32 %v420, 2147483648
    %v506 = vsel %vm504, %v505, %v503
    %v507 = vrsqrt.pop %v422
    %v508 = vmul.f32 %v507, %v422
    %v509 = vmul.f32 %v508, %v507
    %v510 = vmul.f32 0.5, %v509
    %v511 = vsub.f32 1.5, %v510
    %v512 = vmul.f32 %v507, %v511
    %v513 = vmul.f32 %v422, %v512
    %vm514 = vcmp.eq.f32.partialorder %v422, inf
    %v515 = vsel %vm514, %v422, %v513
    %vm516 = vcmp.eq.f32.partialorder %v422, 0.0
    %v517 = vand.u32 %v422, 2147483648
    %v518 = vsel %vm516, %v517, %v515
    %v519 = vrsqrt.pop %v424
    %v520 = vmul.f32 %v519, %v424
    %v521 = vmul.f32 %v520, %v519
    %v522 = vmul.f32 0.5, %v521
    %v523 = vsub.f32 1.5, %v522
    %v524 = vmul.f32 %v519, %v523
    %v525 = vmul.f32 %v424, %v524
    %vm526 = vcmp.eq.f32.partialorder %v424, inf
    %v527 = vsel %vm526, %v424, %v525
    %vm528 = vcmp.eq.f32.partialorder %v424, 0.0
    %v529 = vand.u32 %v424, 2147483648
    %v530 = vsel %vm528, %v529, %v527
    %v531 = vrsqrt.pop %v426
    %v532 = vmul.f32 %v531, %v426
    %v533 = vmul.f32 %v532, %v531
    %v534 = vmul.f32 0.5, %v533
    %v535 = vsub.f32 1.5, %v534
    %v536 = vmul.f32 %v531, %v535
    %v537 = vmul.f32 %v426, %v536
    %vm538 = vcmp.eq.f32.partialorder %v426, inf
    %v539 = vsel %vm538, %v426, %v537
    %vm540 = vcmp.eq.f32.partialorder %v426, 0.0
    %v541 = vand.u32 %v426, 2147483648
    %v542 = vsel %vm540, %v541, %v539
    %v543 = vrsqrt.pop %v428
    %v544 = vmul.f32 %v543, %v428
    %v545 = vmul.f32 %v544, %v543
    %v546 = vmul.f32 0.5, %v545
    %v547 = vsub.f32 1.5, %v546
    %v548 = vmul.f32 %v543, %v547
    %v549 = vmul.f32 %v428, %v548
    %vm550 = vcmp.eq.f32.partialorder %v428, inf
    %v551 = vsel %vm550, %v428, %v549
    %vm552 = vcmp.eq.f32.partialorder %v428, 0.0
    %v553 = vand.u32 %v428, 2147483648
    %v554 = vsel %vm552, %v553, %v551
    %v555 = vrsqrt.pop %v430
    %v556 = vmul.f32 %v555, %v430
    %v557 = vmul.f32 %v556, %v555
    %v558 = vmul.f32 0.5, %v557
    %v559 = vsub.f32 1.5, %v558
    %v560 = vmul.f32 %v555, %v559
    %v561 = vmul.f32 %v430, %v560
    %vm562 = vcmp.eq.f32.partialorder %v430, inf
    %v563 = vsel %vm562, %v430, %v561
    %vm564 = vcmp.eq.f32.partialorder %v430, 0.0
    %v565 = vand.u32 %v430, 2147483648
    %v566 = vsel %vm564, %v565, %v563
    %v567 = vrsqrt.pop %v432
    %v568 = vmul.f32 %v567, %v432
    %v569 = vmul.f32 %v568, %v567
    %v570 = vmul.f32 0.5, %v569
    %v571 = vsub.f32 1.5, %v570
    %v572 = vmul.f32 %v567, %v571
    %v573 = vmul.f32 %v432, %v572
    %vm574 = vcmp.eq.f32.partialorder %v432, inf
    %v575 = vsel %vm574, %v432, %v573
    %vm576 = vcmp.eq.f32.partialorder %v432, 0.0
    %v577 = vand.u32 %v432, 2147483648
    %v578 = vsel %vm576, %v577, %v575
    %v579 = vrsqrt.pop %v434
    %v580 = vmul.f32 %v579, %v434
    %v581 = vmul.f32 %v580, %v579
    %v582 = vmul.f32 0.5, %v581
    %v583 = vsub.f32 1.5, %v582
    %v584 = vmul.f32 %v579, %v583
    %v585 = vmul.f32 %v434, %v584
    %vm586 = vcmp.eq.f32.partialorder %v434, inf
    %v587 = vsel %vm586, %v434, %v585
    %vm588 = vcmp.eq.f32.partialorder %v434, 0.0
    %v589 = vand.u32 %v434, 2147483648
    %v590 = vsel %vm588, %v589, %v587
    %v591 = vsub.f32 %v225, %v446
    %v592 = vsub.f32 %v237, %v458
    %v593 = vsub.f32 %v249, %v470
    %v594 = vsub.f32 %v261, %v482
    %v595 = vsub.f32 %v273, %v494
    %v596 = vsub.f32 %v285, %v506
    %v597 = vsub.f32 %v297, %v518
    %v598 = vsub.f32 %v309, %v530
    %v599 = vsub.f32 %v321, %v542
    %v600 = vsub.f32 %v333, %v554
    %v601 = vsub.f32 %v345, %v566
    %v602 = vsub.f32 %v357, %v578
    %v603 = vsub.f32 %v369, %v590
    %v604 = vmul.f32 %v591, 1.442695
    %v605 = vpow.pop %v604
    %v606 = vmul.f32 %v592, 1.442695
    %v607 = vpow.pop %v606
    %v608 = vmul.f32 %v593, 1.442695
    %v609 = vpow.pop %v608
    %v610 = vmul.f32 %v594, 1.442695
    %v611 = vpow.pop %v610
    %v612 = vmul.f32 %v595, 1.442695
    %v613 = vpow.pop %v612
    %v614 = vmul.f32 %v596, 1.442695
    %v615 = vpow.pop %v614
    %v616 = vmul.f32 %v597, 1.442695
    %v617 = vpow.pop %v616
    %v618 = vmul.f32 %v598, 1.442695
    %v619 = vpow.pop %v618
    %v620 = vmul.f32 %v599, 1.442695
    %v621 = vpow.pop %v620
    %v622 = vmul.f32 %v600, 1.442695
    %v623 = vpow.pop %v622
    %v624 = vmul.f32 %v601, 1.442695
    %v625 = vpow.pop %v624
    %v626 = vmul.f32 %v602, 1.442695
    %v627 = vpow.pop %v626
    %v628 = vmul.f32 %v603, 1.442695
    %v629 = vpow.pop %v628
    %v630 = vadd.f32 %v605, 1.0
    %v631 = vlog2.pop %v630
    %v632 = vmul.f32 %v631, 0.6931472
    %v633 = vmul.f32 -0.5, %v605
    %v634 = vadd.f32 %v633, 1.0
    %v635 = vmul.f32 %v634, %v605
    %v636 = vand.u32 2147483647, %v605
    %vm637 = vcmp.lt.f32.partialorder %v636, 0.0004427343
    %v638 = vsel %vm637, %v635, %v632
    %v639 = vadd.f32 %v607, 1.0
    %v640 = vlog2.pop %v639
    %v641 = vmul.f32 %v640, 0.6931472
    %v642 = vmul.f32 -0.5, %v607
    %v643 = vadd.f32 %v642, 1.0
    %v644 = vmul.f32 %v643, %v607
    %v645 = vand.u32 2147483647, %v607
    %vm646 = vcmp.lt.f32.partialorder %v645, 0.0004427343
    %v647 = vsel %vm646, %v644, %v641
    %v648 = vadd.f32 %v609, 1.0
    %v649 = vlog2.pop %v648
    %v650 = vmul.f32 %v649, 0.6931472
    %v651 = vmul.f32 -0.5, %v609
    %v652 = vadd.f32 %v651, 1.0
    %v653 = vmul.f32 %v652, %v609
    %v654 = vand.u32 2147483647, %v609
    %vm655 = vcmp.lt.f32.partialorder %v654, 0.0004427343
    %v656 = vsel %vm655, %v653, %v650
    %v657 = vadd.f32 %v611, 1.0
    %v658 = vlog2.pop %v657
    %v659 = vmul.f32 %v658, 0.6931472
    %v660 = vmul.f32 -0.5, %v611
    %v661 = vadd.f32 %v660, 1.0
    %v662 = vmul.f32 %v661, %v611
    %v663 = vand.u32 2147483647, %v611
    %vm664 = vcmp.lt.f32.partialorder %v663, 0.0004427343
    %v665 = vsel %vm664, %v662, %v659
    %v666 = vadd.f32 %v613, 1.0
    %v667 = vlog2.pop %v666
    %v668 = vmul.f32 %v667, 0.6931472
    %v669 = vmul.f32 -0.5, %v613
    %v670 = vadd.f32 %v669, 1.0
    %v671 = vmul.f32 %v670, %v613
    %v672 = vand.u32 2147483647, %v613
    %vm673 = vcmp.lt.f32.partialorder %v672, 0.0004427343
    %v674 = vsel %vm673, %v671, %v668
    %v675 = vadd.f32 %v615, 1.0
    %v676 = vlog2.pop %v675
    %v677 = vmul.f32 %v676, 0.6931472
    %v678 = vmul.f32 -0.5, %v615
    %v679 = vadd.f32 %v678, 1.0
    %v680 = vmul.f32 %v679, %v615
    %v681 = vand.u32 2147483647, %v615
    %vm682 = vcmp.lt.f32.partialorder %v681, 0.0004427343
    %v683 = vsel %vm682, %v680, %v677
    %v684 = vadd.f32 %v617, 1.0
    %v685 = vlog2.pop %v684
    %v686 = vmul.f32 %v685, 0.6931472
    %v687 = vmul.f32 -0.5, %v617
    %v688 = vadd.f32 %v687, 1.0
    %v689 = vmul.f32 %v688, %v617
    %v690 = vand.u32 2147483647, %v617
    %vm691 = vcmp.lt.f32.partialorder %v690, 0.0004427343
    %v692 = vsel %vm691, %v689, %v686
    %v693 = vadd.f32 %v619, 1.0
    %v694 = vlog2.pop %v693
    %v695 = vmul.f32 %v694, 0.6931472
    %v696 = vmul.f32 -0.5, %v619
    %v697 = vadd.f32 %v696, 1.0
    %v698 = vmul.f32 %v697, %v619
    %v699 = vand.u32 2147483647, %v619
    %vm700 = vcmp.lt.f32.partialorder %v699, 0.0004427343
    %v701 = vsel %vm700, %v698, %v695
    %v702 = vadd.f32 %v621, 1.0
    %v703 = vlog2.pop %v702
    %v704 = vmul.f32 %v703, 0.6931472
    %v705 = vmul.f32 -0.5, %v621
    %v706 = vadd.f32 %v705, 1.0
    %v707 = vmul.f32 %v706, %v621
    %v708 = vand.u32 2147483647, %v621
    %vm709 = vcmp.lt.f32.partialorder %v708, 0.0004427343
    %v710 = vsel %vm709, %v707, %v704
    %v711 = vadd.f32 %v623, 1.0
    %v712 = vlog2.pop %v711
    %v713 = vmul.f32 %v712, 0.6931472
    %v714 = vmul.f32 -0.5, %v623
    %v715 = vadd.f32 %v714, 1.0
    %v716 = vmul.f32 %v715, %v623
    %v717 = vand.u32 2147483647, %v623
    %vm718 = vcmp.lt.f32.partialorder %v717, 0.0004427343
    %v719 = vsel %vm718, %v716, %v713
    %v720 = vadd.f32 %v625, 1.0
    %v721 = vlog2.pop %v720
    %v722 = vmul.f32 %v721, 0.6931472
    %v723 = vmul.f32 -0.5, %v625
    %v724 = vadd.f32 %v723, 1.0
    %v725 = vmul.f32 %v724, %v625
    %v726 = vand.u32 2147483647, %v625
    %vm727 = vcmp.lt.f32.partialorder %v726, 0.0004427343
    %v728 = vsel %vm727, %v725, %v722
    %v729 = vadd.f32 %v627, 1.0
    %v730 = vlog2.pop %v729
    %v731 = vmul.f32 %v730, 0.6931472
    %v732 = vmul.f32 -0.5, %v627
    %v733 = vadd.f32 %v732, 1.0
    %v734 = vmul.f32 %v733, %v627
    %v735 = vand.u32 2147483647, %v627
    %vm736 = vcmp.lt.f32.partialorder %v735, 0.0004427343
    %v737 = vsel %vm736, %v734, %v731
    %v738 = vadd.f32 %v629, 1.0
    %v739 = vlog2.pop %v738
    %v740 = vmul.f32 %v739, 0.6931472
    %v741 = vmul.f32 -0.5, %v629
    %v742 = vadd.f32 %v741, 1.0
    %v743 = vmul.f32 %v742, %v629
    %v744 = vand.u32 2147483647, %v629
    %vm745 = vcmp.lt.f32.partialorder %v744, 0.0004427343
    %v746 = vsel %vm745, %v743, %v740
    %s747 = sadd.s32 0, 0
    %p748 = scmp.lt.s32.totalorder %s747, 0
    // Predicated region
    $region30: #{tpu_custom_call.1} parent=1 // pred_check
      %p749 = pneg %p748
    $region31: #{tpu_custom_call.1} parent=1 // pred_check_branch
      %751 = sbr.rel (%p749) target = $region33
    $region32: #{tpu_custom_call.1} parent=1 // pred_region
      %v752 = vld [vmem:[#allocation2] sm:$0xff]
      %v753 = vld [vmem:[#allocation2 + $0x8] sm:$0xff]
      %v754 = vld [vmem:[#allocation2 + $0x10] sm:$0xff]
      %v755 = vld [vmem:[#allocation2 + $0x18] sm:$0xff]
      %v756 = vld [vmem:[#allocation2 + $0x20] sm:$0xff]
      %v757 = vld [vmem:[#allocation2 + $0x28] sm:$0xff]
      %v758 = vld [vmem:[#allocation2 + $0x30] sm:$0xff]
      %v759 = vld [vmem:[#allocation2 + $0x38] sm:$0xff]
      %v760 = vld [vmem:[#allocation2 + $0x40] sm:$0xff]
      %v761 = vld [vmem:[#allocation2 + $0x48] sm:$0xff]
      %v762 = vld [vmem:[#allocation2 + $0x50] sm:$0xff]
      %v763 = vld [vmem:[#allocation2 + $0x58] sm:$0xff]
      %v764 = vld [vmem:[#allocation2 + $0x60] sm:$0xff]
      %v765 = vadd.f32 %v752, %v638
      %v766 = vadd.f32 %v753, %v647
      %v767 = vadd.f32 %v754, %v656
      %v768 = vadd.f32 %v755, %v665
      %v769 = vadd.f32 %v756, %v674
      %v770 = vadd.f32 %v757, %v683
      %v771 = vadd.f32 %v758, %v692
      %v772 = vadd.f32 %v759, %v701
      %v773 = vadd.f32 %v760, %v710
      %v774 = vadd.f32 %v761, %v719
      %v775 = vadd.f32 %v762, %v728
      %v776 = vadd.f32 %v763, %v737
      %v777 = vadd.f32 %v764, %v746
      %vm778 = vcmask 7168
      %779 = vst.msk [vmem:[#allocation2] sm:$0xff] %vm778, %v765
      %780 = vst.msk [vmem:[#allocation2 + $0x8] sm:$0xff] %vm778, %v766
      %781 = vst.msk [vmem:[#allocation2 + $0x10] sm:$0xff] %vm778, %v767
      %782 = vst.msk [vmem:[#allocation2 + $0x18] sm:$0xff] %vm778, %v768
      %783 = vst.msk [vmem:[#allocation2 + $0x20] sm:$0xff] %vm778, %v769
      %784 = vst.msk [vmem:[#allocation2 + $0x28] sm:$0xff] %vm778, %v770
      %785 = vst.msk [vmem:[#allocation2 + $0x30] sm:$0xff] %vm778, %v771
      %786 = vst.msk [vmem:[#allocation2 + $0x38] sm:$0xff] %vm778, %v772
      %787 = vst.msk [vmem:[#allocation2 + $0x40] sm:$0xff] %vm778, %v773
      %788 = vst.msk [vmem:[#allocation2 + $0x48] sm:$0xff] %vm778, %v774
      %789 = vst.msk [vmem:[#allocation2 + $0x50] sm:$0xff] %vm778, %v775
      %790 = vst.msk [vmem:[#allocation2 + $0x58] sm:$0xff] %vm778, %v776
      %791 = vst.msk [vmem:[#allocation2 + $0x60] sm:$0xff] %vm778, %v777
    $region33: #{tpu_custom_call.1} parent=1 // pred_fallthru
      _
    %p792 = scmp.ge.s32.totalorder %s747, 0
    // Predicated region
    $region34: #{tpu_custom_call.1} parent=1 // pred_check
      %p793 = pneg %p792
    $region35: #{tpu_custom_call.1} parent=1 // pred_check_branch
      %795 = sbr.rel (%p793) target = $region37
    $region36: #{tpu_custom_call.1} parent=1 // pred_region
      %s796 = smul.u32 %s747, 104
      %v797 = vlaneseq
      %v798 = vshrl.u32 %v797, 7
      %v799 = vadd.s32 %v798, 8
      %v800 = vadd.s32 %v798, 16
      %v801 = vadd.s32 %v798, 24
      %v802 = vadd.s32 %v798, 32
      %v803 = vadd.s32 %v798, 40
      %v804 = vadd.s32 %v798, 48
      %v805 = vadd.s32 %v798, 56
      %v806 = vadd.s32 %v798, 64
      %v807 = vadd.s32 %v798, 72
      %v808 = vadd.s32 %v798, 80
      %v809 = vadd.s32 %v798, 88
      %v810 = vadd.s32 %v798, 96
      %v811 = vstv %s796
      %v812 = vadd.s32 %v811, %v798
      %v813 = vadd.s32 %v811, %v799
      %v814 = vadd.s32 %v811, %v800
      %v815 = vadd.s32 %v811, %v801
      %v816 = vadd.s32 %v811, %v802
      %v817 = vadd.s32 %v811, %v803
      %v818 = vadd.s32 %v811, %v804
      %v819 = vadd.s32 %v811, %v805
      %v820 = vadd.s32 %v811, %v806
      %v821 = vadd.s32 %v811, %v807
      %v822 = vadd.s32 %v811, %v808
      %v823 = vadd.s32 %v811, %v809
      %v824 = vadd.s32 %v811, %v810
      %v825 = vld [vmem:[#allocation2] sm:$0xff]
      %v826 = vld [vmem:[#allocation2 + $0x8] sm:$0xff]
      %v827 = vld [vmem:[#allocation2 + $0x10] sm:$0xff]
      %v828 = vld [vmem:[#allocation2 + $0x18] sm:$0xff]
      %v829 = vld [vmem:[#allocation2 + $0x20] sm:$0xff]
      %v830 = vld [vmem:[#allocation2 + $0x28] sm:$0xff]
      %v831 = vld [vmem:[#allocation2 + $0x30] sm:$0xff]
      %v832 = vld [vmem:[#allocation2 + $0x38] sm:$0xff]
      %v833 = vld [vmem:[#allocation2 + $0x40] sm:$0xff]
      %v834 = vld [vmem:[#allocation2 + $0x48] sm:$0xff]
      %v835 = vld [vmem:[#allocation2 + $0x50] sm:$0xff]
      %v836 = vld [vmem:[#allocation2 + $0x58] sm:$0xff]
      %v837 = vld [vmem:[#allocation2 + $0x60] sm:$0xff]
      %vm838 = vcmp.lt.s32.totalorder %v812, 100
      %vm839 = vcmp.lt.s32.totalorder %v813, 100
      %vm840 = vcmp.lt.s32.totalorder %v814, 100
      %vm841 = vcmp.lt.s32.totalorder %v815, 100
      %vm842 = vcmp.lt.s32.totalorder %v816, 100
      %vm843 = vcmp.lt.s32.totalorder %v817, 100
      %vm844 = vcmp.lt.s32.totalorder %v818, 100
      %vm845 = vcmp.lt.s32.totalorder %v819, 100
      %vm846 = vcmp.lt.s32.totalorder %v820, 100
      %vm847 = vcmp.lt.s32.totalorder %v821, 100
      %vm848 = vcmp.lt.s32.totalorder %v822, 100
      %vm849 = vcmp.lt.s32.totalorder %v823, 100
      %vm850 = vcmp.lt.s32.totalorder %v824, 100
      %v851 = vsel %vm838, %v638, 0.0
      %v852 = vsel %vm839, %v647, 0.0
      %v853 = vsel %vm840, %v656, 0.0
      %v854 = vsel %vm841, %v665, 0.0
      %v855 = vsel %vm842, %v674, 0.0
      %v856 = vsel %vm843, %v683, 0.0
      %v857 = vsel %vm844, %v692, 0.0
      %v858 = vsel %vm845, %v701, 0.0
      %v859 = vsel %vm846, %v710, 0.0
      %v860 = vsel %vm847, %v719, 0.0
      %v861 = vsel %vm848, %v728, 0.0
      %v862 = vsel %vm849, %v737, 0.0
      %v863 = vsel %vm850, %v746, 0.0
      %v864 = vadd.f32 %v825, %v851
      %v865 = vadd.f32 %v826, %v852
      %v866 = vadd.f32 %v827, %v853
      %v867 = vadd.f32 %v828, %v854
      %v868 = vadd.f32 %v829, %v855
      %v869 = vadd.f32 %v830, %v856
      %v870 = vadd.f32 %v831, %v857
      %v871 = vadd.f32 %v832, %v858
      %v872 = vadd.f32 %v833, %v859
      %v873 = vadd.f32 %v834, %v860
      %v874 = vadd.f32 %v835, %v861
      %v875 = vadd.f32 %v836, %v862
      %v876 = vadd.f32 %v837, %v863
      %vm877 = vcmask 7168
      %878 = vst.msk [vmem:[#allocation2] sm:$0xff] %vm877, %v864
      %879 = vst.msk [vmem:[#allocation2 + $0x8] sm:$0xff] %vm877, %v865
      %880 = vst.msk [vmem:[#allocation2 + $0x10] sm:$0xff] %vm877, %v866
      %881 = vst.msk [vmem:[#allocation2 + $0x18] sm:$0xff] %vm877, %v867
      %882 = vst.msk [vmem:[#allocation2 + $0x20] sm:$0xff] %vm877, %v868
      %883 = vst.msk [vmem:[#allocation2 + $0x28] sm:$0xff] %vm877, %v869
      %884 = vst.msk [vmem:[#allocation2 + $0x30] sm:$0xff] %vm877, %v870
      %885 = vst.msk [vmem:[#allocation2 + $0x38] sm:$0xff] %vm877, %v871
      %886 = vst.msk [vmem:[#allocation2 + $0x40] sm:$0xff] %vm877, %v872
      %887 = vst.msk [vmem:[#allocation2 + $0x48] sm:$0xff] %vm877, %v873
      %888 = vst.msk [vmem:[#allocation2 + $0x50] sm:$0xff] %vm877, %v874
      %889 = vst.msk [vmem:[#allocation2 + $0x58] sm:$0xff] %vm877, %v875
      %890 = vst.msk [vmem:[#allocation2 + $0x60] sm:$0xff] %vm877, %v876
    $region37: #{tpu_custom_call.1} parent=1 // pred_fallthru
      _
    // Predicated region
    $region38: #{tpu_custom_call.1} parent=1 // pred_check
      %p891 = pneg %p92
    $region39: #{tpu_custom_call.1} parent=1 // pred_check_branch
      %893 = sbr.rel (%p891) target = $region41
    $region40: #{tpu_custom_call.1} parent=1 // pred_region
      %v894 = vld [vmem:[#allocation2] sm:$0xff]
      %v895 = vld [vmem:[#allocation2 + $0x8] sm:$0xff]
      %v896 = vld [vmem:[#allocation2 + $0x10] sm:$0xff]
      %v897 = vld [vmem:[#allocation2 + $0x18] sm:$0xff]
      %v898 = vld [vmem:[#allocation2 + $0x20] sm:$0xff]
      %v899 = vld [vmem:[#allocation2 + $0x28] sm:$0xff]
      %v900 = vld [vmem:[#allocation2 + $0x30] sm:$0xff]
      %v901 = vld [vmem:[#allocation2 + $0x38] sm:$0xff]
      %v902 = vld [vmem:[#allocation2 + $0x40] sm:$0xff]
      %v903 = vld [vmem:[#allocation2 + $0x48] sm:$0xff]
      %v904 = vld [vmem:[#allocation2 + $0x50] sm:$0xff]
      %v905 = vld [vmem:[#allocation2 + $0x58] sm:$0xff]
      %v906 = vld [vmem:[#allocation2 + $0x60] sm:$0xff]
      %vm907 = vcmask 7168
      %v908 = vsel %vm907, %v894, 0.0
      %v909 = vsel %vm907, %v895, 0.0
      %v910 = vadd.f32 %v908, %v909
      %v911 = vsel %vm907, %v896, 0.0
      %v912 = vadd.f32 %v910, %v911
      %v913 = vsel %vm907, %v897, 0.0
      %v914 = vadd.f32 %v912, %v913
      %v915 = vsel %vm907, %v898, 0.0
      %v916 = vadd.f32 %v914, %v915
      %v917 = vsel %vm907, %v899, 0.0
      %v918 = vadd.f32 %v916, %v917
      %v919 = vsel %vm907, %v900, 0.0
      %v920 = vadd.f32 %v918, %v919
      %v921 = vsel %vm907, %v901, 0.0
      %v922 = vadd.f32 %v920, %v921
      %v923 = vsel %vm907, %v902, 0.0
      %v924 = vadd.f32 %v922, %v923
      %v925 = vsel %vm907, %v903, 0.0
      %v926 = vadd.f32 %v924, %v925
      %v927 = vsel %vm907, %v904, 0.0
      %v928 = vadd.f32 %v926, %v927
      %v929 = vsel %vm907, %v905, 0.0
      %v930 = vadd.f32 %v928, %v929
      %v931 = vsel %vm907, %v906, 0.0
      %v932 = vadd.f32 %v930, %v931
      %933 = vadd.xlane.f32.xlu0 %v932
      %v934 = vpop.xlane.xlu0 %933
      %v935 = vrot.slane %v934, 4
      %v936 = vadd.f32 %v934, %v935
      %v937 = vrot.slane %v936, 2
      %v938 = vadd.f32 %v936, %v937
      %v939 = vrot.slane %v938, 1
      %v940 = vadd.f32 %v938, %v939
      %s941 = vtos %v940
      %v942 = vlaneseq
      %v943 = vshrl.u32 %v942, 7
      %vm944 = vcmp.eq.s32.totalorder %v943, 0
      %v945 = vlaneseq
      %v946 = vand.u32 %v945, 127
      %vm947 = vcmp.eq.s32.totalorder %v946, 0
      %vm948 = vmand %vm944, %vm947
      %v949 = vstv %s941
      %v950 = vsel %vm948, %v949, 0.0
      %951 = vst [vmem:[#allocation9] sm:$0xff] %v950
    $region41: #{tpu_custom_call.1} parent=1 // pred_fallthru
      _
    // Predicated region
    $region42: #{tpu_custom_call.1} parent=1 // pred_check
      _
    $region43: #{tpu_custom_call.1} parent=1 // pred_check_branch
      %953 = sbr.rel (0) target = $region45
    $region44: #{tpu_custom_call.1} parent=1 // pred_region
      %955 = vsyncadd [#allocation5], 0
      %s957 = sshll.u32 [#allocation9], 4
      %s958 = int_to_ptr.vmem [resolvable:$true] %s957
      %s959 = sshll.u32 %s3, 4
      %s960 = int_to_ptr.hbm [resolvable:$true] %s959
      %962 = dma.vmem_to_hbm [thread:$0]  %s958, 128, %s960, [#allocation5]
    $region45: #{tpu_custom_call.1} parent=1 // pred_fallthru
      _
    // Predicated region
    $region46: #{tpu_custom_call.1} parent=1 // pred_check
      _
    $region47: #{tpu_custom_call.1} parent=1 // pred_check_branch
      %964 = sbr.rel (0) target = $region49
    $region48: #{tpu_custom_call.1} parent=1 // pred_region
      %966 = dma.done [#allocation5], 128
    $region49: #{tpu_custom_call.1} parent=1 // pred_fallthru
      _
    %967 = vsyncpa [#allocation4], 1
    %968 = vsyncpa [#allocation7], 1
    %969 = vsyncpa [#allocation5], 1

</llo_original>
